<compile_context>
chip_gen: v7x
topology: tpu7x:2x2x1
jax: 0.10.0
libtpu: 0.0.40
codegen_flags: <defaults>
</compile_context>

<pallas_src>
import jax
import jax.numpy as jnp
from jax import lax
from jax.experimental import pallas as pl
from jax.experimental.pallas import tpu as pltpu


def _attention_kernel(len_ref, src_ref, tgt_ref, wt_ref, attn_ref, align_ref):
    """One grid step == one (batch, target-block) tile."""
    b = pl.program_id(0)

    src = src_ref[0]                      # (S, D)
    tgt = tgt_ref[0]                      # (Tb, D)
    D = src.shape[1]

    # scores = target @ src^T  -> (Tb, S), f32 accumulation on the MXU.
    scores = lax.dot_general(
        tgt, src,
        dimension_numbers=(((1,), (1,)), ((), ())),
        preferred_element_type=jnp.float32)

    # sequence mask: column j is valid iff j < src_lengths[b]   (lengths in SMEM)
    length = len_ref[b]
    col = lax.broadcasted_iota(jnp.int32, scores.shape, 1)
    scores = jnp.where(col < length, scores, -jnp.inf)

    # softmax along the source axis.
    m = jnp.max(scores, axis=-1, keepdims=True)
    e = jnp.exp(scores - m)
    s = jnp.sum(e, axis=-1, keepdims=True)
    p = e / s                             # (Tb, S); masked cols are exactly 0

    align_ref[0] = p.astype(align_ref.dtype)

    # context = align @ src  -> (Tb, D)
    c = jnp.dot(p, src, preferred_element_type=jnp.float32)

    # attn_h = cat([c, target]) @ W_out^T, fused as two dots against the two
    # halves of W_out^T (wt_ref is (2D, D)).
    attn = (jnp.dot(c, wt_ref[:D, :], preferred_element_type=jnp.float32)
            + jnp.dot(tgt, wt_ref[D:, :], preferred_element_type=jnp.float32))
    attn_ref[0] = attn.astype(attn_ref.dtype)


def attention_forward(src, target, src_lengths, w_out, *, t_block=None):
    """src: (B,S,D) f32; target: (B,T,D) f32; src_lengths: (B,) int32;
    w_out: (D, 2D) f32 (nn.Linear(dim*2, dim, bias=False).weight).
    Returns (attn_h (B,T,D), align_score (B,T,S))."""
    B, S, D = src.shape
    _, T, _ = target.shape
    if t_block is None:
        t_block = T

    src = jnp.asarray(src, jnp.float32)
    target = jnp.asarray(target, jnp.float32)
    wt = jnp.asarray(w_out, jnp.float32).T            # (2D, D)
    lens = jnp.asarray(src_lengths, jnp.int32)        # (B,) -> SMEM via prefetch

    grid = (B, pl.cdiv(T, t_block))

    grid_spec = pltpu.PrefetchScalarGridSpec(
        num_scalar_prefetch=1,
        grid=grid,
        in_specs=[
            pl.BlockSpec((1, S, D), lambda b, tb, lens: (b, 0, 0)),      # src
            pl.BlockSpec((1, t_block, D), lambda b, tb, lens: (b, tb, 0)),  # target
            pl.BlockSpec((2 * D, D), lambda b, tb, lens: (0, 0)),        # W_out^T
        ],
        out_specs=[
            pl.BlockSpec((1, t_block, D), lambda b, tb, lens: (b, tb, 0)),  # attn_h
            pl.BlockSpec((1, t_block, S), lambda b, tb, lens: (b, tb, 0)),  # align
        ],
        scratch_shapes=[],
    )

    attn_h, align = pl.pallas_call(
        _attention_kernel,
        out_shape=(
            jax.ShapeDtypeStruct((B, T, D), jnp.float32),
            jax.ShapeDtypeStruct((B, T, S), jnp.float32),
        ),
        grid_spec=grid_spec,
        compiler_params=pltpu.CompilerParams(
            dimension_semantics=("parallel", "parallel")),
    )(lens, src, target, wt)

    return attn_h, align


def _reference_forward(src, target, src_lengths, w_out):
    """Pure-JAX reference of the PyTorch Attention.forward."""
    B, S, D = src.shape
    scores = jnp.einsum("btd,bsd->bts", target, src,
                        precision=lax.Precision.HIGHEST)
    mask = jnp.arange(S)[None, :] < src_lengths[:, None]          # (B, S)
    scores = jnp.where(mask[:, None, :], scores, -jnp.inf)
    align = jax.nn.softmax(scores, axis=-1)
    c = jnp.einsum("bts,bsd->btd", align, src,
                   precision=lax.Precision.HIGHEST)
    concat = jnp.concatenate([c, target], axis=-1)                # (B, T, 2D)
    attn_h = jnp.einsum("bte,de->btd", concat, w_out,
                        precision=lax.Precision.HIGHEST)
    return attn_h, align


if __name__ == "__main__":
    # Small, lane-dense TPU-friendly shapes: S and D are multiples of 128,
    # the target block is a full (8, 128) tile.
    B, S, T, D = 2, 128, 8, 128

    key = jax.random.PRNGKey(0)
    k_src, k_tgt, k_w = jax.random.split(key, 3)

    src = jax.random.normal(k_src, (B, S, D), jnp.float32)
    target = jax.random.normal(k_tgt, (B, T, D), jnp.float32)
    # max(src_lengths) == S (matches sequence_mask(max_len=lengths.max())).
    src_lengths = jnp.array([S, 96], jnp.int32)

    # PyTorch nn.Linear default init: U(-1/sqrt(fan_in), 1/sqrt(fan_in)).
    bound = 1.0 / jnp.sqrt(jnp.float32(2 * D))
    w_out = jax.random.uniform(k_w, (D, 2 * D), jnp.float32, -bound, bound)

    attn_h, align = attention_forward(src, target, src_lengths, w_out)
    jax.block_until_ready((attn_h, align))

    attn_r, align_r = _reference_forward(src, target, src_lengths, w_out)
    assert jnp.allclose(align, align_r, atol=1e-3, rtol=1e-3), "align mismatch"
    assert jnp.allclose(attn_h, attn_r, atol=1e-3, rtol=1e-3), "attn_h mismatch"

    print("KERNEL_OK")
</pallas_src>

<mosaic_0001>
module attributes {stable_mosaic.version = 11 : i64} {
  func.func @_attention_kernel(%arg0: i32, %arg1: i32, %arg2: memref<2xi32, #tpu.memory_space<smem>>, %arg3: memref<1x128x128xf32, #tpu.memory_space<vmem>>, %arg4: memref<1x8x128xf32, #tpu.memory_space<vmem>>, %arg5: memref<256x128xf32, #tpu.memory_space<vmem>>, %arg6: memref<1x8x128xf32, #tpu.memory_space<vmem>>, %arg7: memref<1x8x128xf32, #tpu.memory_space<vmem>>) attributes {dimension_semantics = [#tpu.dimension_semantics<parallel>, #tpu.dimension_semantics<parallel>], iteration_bounds = array<i64: 2, 1>, scalar_prefetch = 1 : i64, scratch_operands = 0 : i64, tpu.core_type = #tpu.core_type<tc>, window_params = [{transform_indices = @transform_0, window_bounds = array<i64: 1, 128, 128>}, {transform_indices = @transform_1, window_bounds = array<i64: 1, 8, 128>}, {pipeline_mode = #tpu.pipeline_mode<synchronous>, transform_indices = @transform_2, window_bounds = array<i64: 256, 128>}, {transform_indices = @transform_3, window_bounds = array<i64: 1, 8, 128>}, {transform_indices = @transform_4, window_bounds = array<i64: 1, 8, 128>}]} {
    %c0 = arith.constant 0 : index
    %c0_0 = arith.constant 0 : index
    %c0_1 = arith.constant 0 : index
    %0 = vector.load %arg3[%c0, %c0_0, %c0_1] : memref<1x128x128xf32, #tpu.memory_space<vmem>>, vector<1x128x128xf32>
    %1 = vector.shape_cast %0 : vector<1x128x128xf32> to vector<128x128xf32>
    %c0_2 = arith.constant 0 : index
    %c0_3 = arith.constant 0 : index
    %c0_4 = arith.constant 0 : index
    %2 = vector.load %arg4[%c0_2, %c0_3, %c0_4] : memref<1x8x128xf32, #tpu.memory_space<vmem>>, vector<1x8x128xf32>
    %3 = vector.shape_cast %2 : vector<1x8x128xf32> to vector<8x128xf32>
    %cst = arith.constant dense<0.000000e+00> : vector<8x128xf32>
    %4 = tpu.matmul %3, %1, %cst {dimension_numbers = #tpu.dot_dimension_numbers<[1], [1], [0], [0], [0, 0, 1, 0], [], []>} : vector<8x128xf32>, vector<128x128xf32>, vector<8x128xf32> -> vector<8x128xf32>
    %5 = arith.index_cast %arg0 : i32 to index
    %6 = memref.load %arg2[%5] : memref<2xi32, #tpu.memory_space<smem>>
    %7 = tpu.iota {dimensions = array<i32: 1>} : vector<8x128xi32>
    %8 = vector.broadcast %6 : i32 to vector<8x128xi32>
    %9 = arith.cmpi slt, %7, %8 : vector<8x128xi32>
    %cst_5 = arith.constant 0xFF800000 : f32
    %10 = vector.broadcast %cst_5 : f32 to vector<8x128xf32>
    %11 = arith.select %9, %4, %10 : vector<8x128xi1>, vector<8x128xf32>
    %cst_6 = arith.constant dense<0xFF800000> : vector<8xf32>
    %12 = vector.multi_reduction <maximumf>, %11, %cst_6 [1] : vector<8x128xf32> to vector<8xf32>
    %13 = vector.shape_cast %12 : vector<8xf32> to vector<8x1xf32>
    %14 = vector.broadcast %13 : vector<8x1xf32> to vector<8x128xf32>
    %15 = arith.subf %11, %14 : vector<8x128xf32>
    %16 = math.exp %15 : vector<8x128xf32>
    %cst_7 = arith.constant dense<0.000000e+00> : vector<8xf32>
    %17 = vector.multi_reduction <add>, %16, %cst_7 [1] : vector<8x128xf32> to vector<8xf32>
    %18 = vector.shape_cast %17 : vector<8xf32> to vector<8x1xf32>
    %19 = vector.broadcast %18 : vector<8x1xf32> to vector<8x128xf32>
    %20 = arith.divf %16, %19 : vector<8x128xf32>
    %c0_8 = arith.constant 0 : index
    %c0_9 = arith.constant 0 : index
    %c0_10 = arith.constant 0 : index
    %21 = vector.load %arg7[%c0_8, %c0_9, %c0_10] : memref<1x8x128xf32, #tpu.memory_space<vmem>>, vector<1x8x128xf32>
    %22 = vector.shape_cast %21 : vector<1x8x128xf32> to vector<8x128xf32>
    %23 = vector.shape_cast %20 : vector<8x128xf32> to vector<1x8x128xf32>
    tpu.vector_store %arg7[%c0_8, %c0_9, %c0_10], %23 {strides = array<i32>} : memref<1x8x128xf32, #tpu.memory_space<vmem>>, vector<1x8x128xf32>,
    %cst_11 = arith.constant dense<0.000000e+00> : vector<8x128xf32>
    %24 = tpu.matmul %20, %1, %cst_11 {dimension_numbers = #tpu.dot_dimension_numbers<[1], [0], [0], [1], [0, 0, 1, 1], [], []>} : vector<8x128xf32>, vector<128x128xf32>, vector<8x128xf32> -> vector<8x128xf32>
    %c0_12 = arith.constant 0 : index
    %c0_13 = arith.constant 0 : index
    %25 = vector.load %arg5[%c0_12, %c0_13] : memref<256x128xf32, #tpu.memory_space<vmem>>, vector<128x128xf32>
    %cst_14 = arith.constant dense<0.000000e+00> : vector<8x128xf32>
    %26 = tpu.matmul %24, %25, %cst_14 {dimension_numbers = #tpu.dot_dimension_numbers<[1], [0], [0], [1], [0, 0, 1, 1], [], []>} : vector<8x128xf32>, vector<128x128xf32>, vector<8x128xf32> -> vector<8x128xf32>
    %c128 = arith.constant 128 : index
    %c0_15 = arith.constant 0 : index
    %27 = vector.load %arg5[%c128, %c0_15] : memref<256x128xf32, #tpu.memory_space<vmem>>, vector<128x128xf32>
    %cst_16 = arith.constant dense<0.000000e+00> : vector<8x128xf32>
    %28 = tpu.matmul %3, %27, %cst_16 {dimension_numbers = #tpu.dot_dimension_numbers<[1], [0], [0], [1], [0, 0, 1, 1], [], []>} : vector<8x128xf32>, vector<128x128xf32>, vector<8x128xf32> -> vector<8x128xf32>
    %29 = arith.addf %26, %28 : vector<8x128xf32>
    %c0_17 = arith.constant 0 : index
    %c0_18 = arith.constant 0 : index
    %c0_19 = arith.constant 0 : index
    %30 = vector.load %arg6[%c0_17, %c0_18, %c0_19] : memref<1x8x128xf32, #tpu.memory_space<vmem>>, vector<1x8x128xf32>
    %31 = vector.shape_cast %30 : vector<1x8x128xf32> to vector<8x128xf32>
    %32 = vector.shape_cast %29 : vector<8x128xf32> to vector<1x8x128xf32>
    tpu.vector_store %arg6[%c0_17, %c0_18, %c0_19], %32 {strides = array<i32>} : memref<1x8x128xf32, #tpu.memory_space<vmem>>, vector<1x8x128xf32>,
    return
  }
  func.func @transform_0(%arg0: i32, %arg1: i32, %arg2: memref<2xi32, #tpu.memory_space<smem>>) -> (i32, i32, i32) {
    %c0_i32 = arith.constant 0 : i32
    %c0_i32_0 = arith.constant 0 : i32
    %c0_i32_1 = arith.constant 0 : i32
    return %arg0, %c0_i32, %c0_i32_0 : i32, i32, i32
  }
  func.func @transform_1(%arg0: i32, %arg1: i32, %arg2: memref<2xi32, #tpu.memory_space<smem>>) -> (i32, i32, i32) {
    %c0_i32 = arith.constant 0 : i32
    %c0_i32_0 = arith.constant 0 : i32
    return %arg0, %arg1, %c0_i32 : i32, i32, i32
  }
  func.func @transform_2(%arg0: i32, %arg1: i32, %arg2: memref<2xi32, #tpu.memory_space<smem>>) -> (i32, i32) {
    %c0_i32 = arith.constant 0 : i32
    %c0_i32_0 = arith.constant 0 : i32
    %c0_i32_1 = arith.constant 0 : i32
    return %c0_i32, %c0_i32_0 : i32, i32
  }
  func.func @transform_3(%arg0: i32, %arg1: i32, %arg2: memref<2xi32, #tpu.memory_space<smem>>) -> (i32, i32, i32) {
    %c0_i32 = arith.constant 0 : i32
    %c0_i32_0 = arith.constant 0 : i32
    return %arg0, %arg1, %c0_i32 : i32, i32, i32
  }
  func.func @transform_4(%arg0: i32, %arg1: i32, %arg2: memref<2xi32, #tpu.memory_space<smem>>) -> (i32, i32, i32) {
    %c0_i32 = arith.constant 0 : i32
    %c0_i32_0 = arith.constant 0 : i32
    return %arg0, %arg1, %c0_i32 : i32, i32, i32
  }
}

</mosaic_0001>

<llo_original>
// kernel: tpu_custom_call.1
$region0: #{tpu_custom_call.1}
  #allocation0 [shape = 'u32[]', space=smem, size = 0x4, offset = 0x4, fixed_abs, tag = 'smem constant byte address 0x4 - core index']
  #allocation1 [shape = 'u32[144,128]{1,0:T(1,128)}', space=vmem, size = 0x12000, scoped, tag = 'internal scratch']
  #allocation2 [shape = 's32[1]{0}', space=sflag, size = 0x4, scoped, tag = 'scoped memory for tpu_custom_call.1']
  #allocation3 [shape = 'u8[512]{0}', space=smem, size = 0x200, scoped, tag = 'prefetched SMEM operand 0']
  %s0 = inlined_call_operand.hbm [shape: s32[2], index: 0, kind: input, shape index: {}]
  %s1 = inlined_call_operand.hbm [shape: f32[2,128,128], index: 1, kind: input, shape index: {}]
  %s2 = inlined_call_operand.hbm [shape: f32[2,8,128], index: 2, kind: input, shape index: {}]
  %s3 = inlined_call_operand.hbm [shape: f32[256,128], index: 3, kind: input, shape index: {}]
  %s4 = inlined_call_operand.hbm [shape: f32[2,8,128], index: 4, kind: output, shape index: {0}]
  %s5 = inlined_call_operand.hbm [shape: f32[2,8,128], index: 5, kind: output, shape index: {1}]
  %6 = xla_tuple %s4, %s5
  %s7 = sld [smem:[#allocation0]]
  $region65: #{tpu_custom_call.1} parent=0
    _
  %s9 = ssub.s32 1, %s7
  %s10 = scalar_select 0, %s9, %s7
  %12 = dma.hbm_to_smem %s0, 16, [#allocation3], [#allocation2]
  %13 = dma.done [#allocation2], 16
  %14 = sfence
  $region1: #{tpu_custom_call.1} parent=0
    #allocation4 [shape = 'u8[131072]{0}', space=vmem, size = 0x20000, scoped, tag = 'input window, operand 1']
    #allocation5 [shape = 's32[2]{0}', space=sflag, size = 0x8, scoped, tag = 'scoped memory for tpu_custom_call.1']
    #allocation6 [shape = 's32[2]{0}', space=sflag, size = 0x8, scoped, tag = 'scoped memory for tpu_custom_call.1']
    #allocation7 [shape = 'u8[8192]{0}', space=vmem, size = 0x2000, scoped, tag = 'input window, operand 2']
    #allocation8 [shape = 's32[2]{0}', space=sflag, size = 0x8, scoped, tag = 'scoped memory for tpu_custom_call.1']
    #allocation9 [shape = 'u8[131072]{0}', space=vmem, size = 0x20000, scoped, tag = 'input window, operand 3, single buffered']
    #allocation10 [shape = 'u8[8192]{0}', space=vmem, size = 0x2000, scoped, tag = 'output window, operand 0']
    #allocation11 [shape = 'u8[8192]{0}', space=vmem, size = 0x2000, scoped, tag = 'output window, operand 1']
    #allocation12 [shape = 's32[2]{0}', space=sflag, size = 0x8, scoped, tag = 'scoped memory for tpu_custom_call.1']
    %15 = vsyncpa [#allocation5], 0
    %s16 = scalar_lea.sflag [#allocation5], 1
    %17 = vsyncpa %s16, 0
    %18 = vsyncpa [#allocation8], 0
    %s19 = scalar_lea.sflag [#allocation8], 1
    %20 = vsyncpa %s19, 0
    %21 = vsyncpa [#allocation6], 0
    %s22 = scalar_lea.sflag [#allocation6], 1
    %23 = vsyncpa %s22, 0
    %24 = vsyncpa [#allocation12], 0
    %s25 = scalar_lea.sflag [#allocation12], 1
    %26 = vsyncpa %s25, 0
    loop: start=0, step=1, limit=4
    $region2: #{tpu_custom_call.1} parent=1 // loop_pre_header
      _
    $region3: #{tpu_custom_call.1} parent=1 // loop_header
      %s28 = sphi 0, %s32
      %p29 = scmp.ge.s32.totalorder %s28, 4
      %s35 = sphi 0, %s47
      %s36 = sphi 0, %s43
      %s37 = sphi 0, %s35
      %s38 = sphi 0, %s36
      %s39 = sphi 0, %s37
      %s40 = sphi 0, %s38
      %s50 = sphi 0, %s52
      %s53 = sphi 0, %s50
      %s54 = sphi 0, %s53
      %s70 = sphi 0, %s54
      %s78 = sphi 0, %s80
      %s81 = sphi 0, %s78
      %s82 = sphi 0, %s81
      %s98 = sphi 0, %s82
      %s102 = sphi 0, %s102
      %s104 = sphi 0, %s102
      %s105 = sphi 0, %s104
      %s119 = sphi 0, %s105
      %s127 = sphi 0, %s129
      %s130 = sphi 0, %s127
      %s131 = sphi 0, %s130
      %s147 = sphi 0, %s131
      %s155 = sphi 0, %s157
      %s158 = sphi 0, %s155
      %s159 = sphi 0, %s158
      %s175 = sphi 0, %s159
    $region4: #{tpu_custom_call.1} parent=1 // loop_header_branch
      %31 = sbr.rel (%p29) target = $region8
    $region5: #{tpu_custom_call.1} parent=1 // loop_body
      %s33 = ssub.s32 %s28, 1
      %s34 = ssub.s32 %s28, 2
      %s41 = sadd.s32 1, %s36
      %p42 = scmp.ge.s32.totalorder %s41, 1
      %s43 = scalar_select %p42, 0, %s41
      %s44 = sadd.s32 1, %s35
      %s45 = scalar_select %p42, %s44, %s35
      %p46 = scmp.ge.s32.totalorder %s45, 2
      %s47 = scalar_select %p46, 0, %s45
      %s48 = ssub.s32 %s35, %s47
      %p49 = scmp.eq.s32.totalorder %s48, 0
      %s51 = sadd.s32 %s50, 1
      %s52 = scalar_select %p49, %s50, %s51
      %p55 = pneg %p49
      %p56 = scmp.eq.s32.totalorder %s28, 1
      %p57 = por %p55, %p56
      %p58 = scmp.ne.s32.totalorder %s50, %s53
      %p59 = scmp.eq.s32.totalorder %s28, 0
      %p60 = por %p58, %p59
      %p61 = scmp.ne.s32.totalorder %s50, %s53
      %p62 = scmp.eq.s32.totalorder %s33, 1
      %p63 = por %p61, %p62
      %p64 = scmp.ne.s32.totalorder %s53, %s54
      %p65 = scmp.eq.s32.totalorder %s33, 0
      %p66 = por %p64, %p65
      %p67 = scmp.ne.s32.totalorder %s53, %s54
      %p68 = scmp.eq.s32.totalorder %s34, 1
      %p69 = por %p67, %p68
      %p71 = scmp.ne.s32.totalorder %s54, %s70
      %p72 = scmp.eq.s32.totalorder %s34, 0
      %p73 = por %p71, %p72
      %s74 = ssub.s32 %s35, %s47
      %s75 = ssub.s32 %s36, %s43
      %s76 = sor.u32 %s74, %s75
      %p77 = scmp.eq.s32.totalorder %s76, 0
      %s79 = sadd.s32 %s78, 1
      %s80 = scalar_select %p77, %s78, %s79
      %p83 = pneg %p77
      %p84 = scmp.eq.s32.totalorder %s28, 1
      %p85 = por %p83, %p84
      %p86 = scmp.ne.s32.totalorder %s78, %s81
      %p87 = scmp.eq.s32.totalorder %s28, 0
      %p88 = por %p86, %p87
      %p89 = scmp.ne.s32.totalorder %s78, %s81
      %p90 = scmp.eq.s32.totalorder %s33, 1
      %p91 = por %p89, %p90
      %p92 = scmp.ne.s32.totalorder %s81, %s82
      %p93 = scmp.eq.s32.totalorder %s33, 0
      %p94 = por %p92, %p93
      %p95 = scmp.ne.s32.totalorder %s81, %s82
      %p96 = scmp.eq.s32.totalorder %s34, 1
      %p97 = por %p95, %p96
      %p99 = scmp.ne.s32.totalorder %s82, %s98
      %p100 = scmp.eq.s32.totalorder %s34, 0
      %p101 = por %p99, %p100
      %s103 = sadd.s32 %s102, 1
      %p106 = scmp.eq.s32.totalorder %s28, 1
      %p107 = scmp.ne.s32.totalorder %s102, %s104
      %p108 = scmp.eq.s32.totalorder %s28, 0
      %p109 = por %p107, %p108
      %p110 = scmp.ne.s32.totalorder %s102, %s104
      %p111 = scmp.eq.s32.totalorder %s33, 1
      %p112 = por %p110, %p111
      %p113 = scmp.ne.s32.totalorder %s104, %s105
      %p114 = scmp.eq.s32.totalorder %s33, 0
      %p115 = por %p113, %p114
      %p116 = scmp.ne.s32.totalorder %s104, %s105
      %p117 = scmp.eq.s32.totalorder %s34, 1
      %p118 = por %p116, %p117
      %p120 = scmp.ne.s32.totalorder %s105, %s119
      %p121 = scmp.eq.s32.totalorder %s34, 0
      %p122 = por %p120, %p121
      %s123 = ssub.s32 %s35, %s47
      %s124 = ssub.s32 %s36, %s43
      %s125 = sor.u32 %s123, %s124
      %p126 = scmp.eq.s32.totalorder %s125, 0
      %s128 = sadd.s32 %s127, 1
      %s129 = scalar_select %p126, %s127, %s128
      %p132 = pneg %p126
      %p133 = scmp.eq.s32.totalorder %s28, 1
      %p134 = por %p132, %p133
      %p135 = scmp.ne.s32.totalorder %s127, %s130
      %p136 = scmp.eq.s32.totalorder %s28, 0
      %p137 = por %p135, %p136
      %p138 = scmp.ne.s32.totalorder %s127, %s130
      %p139 = scmp.eq.s32.totalorder %s33, 1
      %p140 = por %p138, %p139
      %p141 = scmp.ne.s32.totalorder %s130, %s131
      %p142 = scmp.eq.s32.totalorder %s33, 0
      %p143 = por %p141, %p142
      %p144 = scmp.ne.s32.totalorder %s130, %s131
      %p145 = scmp.eq.s32.totalorder %s34, 1
      %p146 = por %p144, %p145
      %p148 = scmp.ne.s32.totalorder %s131, %s147
      %p149 = scmp.eq.s32.totalorder %s34, 0
      %p150 = por %p148, %p149
      %s151 = ssub.s32 %s35, %s47
      %s152 = ssub.s32 %s36, %s43
      %s153 = sor.u32 %s151, %s152
      %p154 = scmp.eq.s32.totalorder %s153, 0
      %s156 = sadd.s32 %s155, 1
      %s157 = scalar_select %p154, %s155, %s156
      %p160 = pneg %p154
      %p161 = scmp.eq.s32.totalorder %s28, 1
      %p162 = por %p160, %p161
      %p163 = scmp.ne.s32.totalorder %s155, %s158
      %p164 = scmp.eq.s32.totalorder %s28, 0
      %p165 = por %p163, %p164
      %p166 = scmp.ne.s32.totalorder %s155, %s158
      %p167 = scmp.eq.s32.totalorder %s33, 1
      %p168 = por %p166, %p167
      %p169 = scmp.ne.s32.totalorder %s158, %s159
      %p170 = scmp.eq.s32.totalorder %s33, 0
      %p171 = por %p169, %p170
      %p172 = scmp.ne.s32.totalorder %s158, %s159
      %p173 = scmp.eq.s32.totalorder %s34, 1
      %p174 = por %p172, %p173
      %p176 = scmp.ne.s32.totalorder %s159, %s175
      %p177 = scmp.eq.s32.totalorder %s34, 0
      %p178 = por %p176, %p177
      %p179 = scmp.le.s32.totalorder 1, %s28
      %p180 = scmp.lt.s32.totalorder %s28, 3
      %p181 = pnand %p179, %p180
      %p182 = pneg %p181
      // Predicated region
      $region9: #{tpu_custom_call.1} parent=5 // pred_check
        _
      $region10: #{tpu_custom_call.1} parent=5 // pred_check_branch
        %184 = sbr.rel (%p181) target = $region12
      $region11: #{tpu_custom_call.1} parent=5 // pred_region
        %s185 = ssub.s32 %s28, 1
        // Predicated region
        $region13: #{tpu_custom_call.1} parent=11 // pred_check
          %p186 = pneg %p115
        $region14: #{tpu_custom_call.1} parent=11 // pred_check_branch
          %188 = sbr.rel (%p186) target = $region16
        $region15: #{tpu_custom_call.1} parent=11 // pred_region
          %s190 = ssub.s32 4096, 4096
          %191 = vsyncadd [#allocation8], %s190
          %s192 = sshll.u32 [#allocation9], 4
          %s193 = int_to_ptr.vmem [resolvable:$true] %s192
          %198 = dma.hbm_to_vmem [thread:$0]  %s3, 4096, %s193, [#allocation8], 128, 128, 8
        $region16: #{tpu_custom_call.1} parent=11 // pred_fallthru
          _
      $region12: #{tpu_custom_call.1} parent=5 // pred_fallthru
        _
      %p199 = scmp.lt.s32.totalorder %s28, 2
      // Predicated region
      $region17: #{tpu_custom_call.1} parent=5 // pred_check
        %p200 = pneg %p199
      $region18: #{tpu_custom_call.1} parent=5 // pred_check_branch
        %202 = sbr.rel (%p200) target = $region20
      $region19: #{tpu_custom_call.1} parent=5 // pred_region
        // Predicated region
        $region21: #{tpu_custom_call.1} parent=19 // pred_check
          %p203 = pneg %p60
        $region22: #{tpu_custom_call.1} parent=19 // pred_check_branch
          %205 = sbr.rel (%p203) target = $region24
        $region23: #{tpu_custom_call.1} parent=19 // pred_region
          %s206 = sand.u32 %s50, 1
          %s207 = scalar_lea.sflag [#allocation5], %s206
          %s208 = sand.u32 %s50, 1
          %s209 = smul.addr %s208, 128
          %s210 = scalar_lea.vmem [#allocation4], %s209
          %s212 = ssub.s32 2048, 2048
          %213 = vsyncadd %s207, %s212
          %s214 = smul.addr %s35, 16
          %s215 = smul.addr %s214, 128
          %s216 = scalar_lea.hbm %s1, %s215
          %s217 = sshll.u32 %s210, 4
          %s218 = int_to_ptr.vmem [resolvable:$true] %s217
          %223 = dma.hbm_to_vmem [thread:$0]  %s216, 2048, %s218, %s207, 128, 128, 8
        $region24: #{tpu_custom_call.1} parent=19 // pred_fallthru
          _
        // Predicated region
        $region25: #{tpu_custom_call.1} parent=19 // pred_check
          %p224 = pneg %p88
        $region26: #{tpu_custom_call.1} parent=19 // pred_check_branch
          %226 = sbr.rel (%p224) target = $region28
        $region27: #{tpu_custom_call.1} parent=19 // pred_region
          %s227 = sand.u32 %s28, 1
          %s228 = scalar_lea.sflag [#allocation8], %s227
          %s229 = sand.u32 %s78, 1
          %s230 = smul.addr %s229, 8
          %s231 = scalar_lea.vmem [#allocation7], %s230
          %s233 = ssub.s32 128, 128
          %234 = vsyncadd %s228, %s233
          %s235 = sadd.s32 %s36, %s35
          %s236 = smul.addr %s235, 128
          %s237 = scalar_lea.hbm %s2, %s236
          %s239 = sshll.u32 %s231, 4
          %s240 = int_to_ptr.vmem [resolvable:$true] %s239
          %242 = dma.hbm_to_vmem [thread:$0]  %s237, 128, %s240, %s228
        $region28: #{tpu_custom_call.1} parent=19 // pred_fallthru
          _
      $region20: #{tpu_custom_call.1} parent=5 // pred_fallthru
        _
      %p243 = scmp.le.s32.totalorder 1, %s28
      %p244 = scmp.lt.s32.totalorder %s28, 3
      %p245 = pnand %p243, %p244
      %p246 = pneg %p245
      // Predicated region
      $region29: #{tpu_custom_call.1} parent=5 // pred_check
        _
      $region30: #{tpu_custom_call.1} parent=5 // pred_check_branch
        %248 = sbr.rel (%p245) target = $region32
      $region31: #{tpu_custom_call.1} parent=5 // pred_region
        %s249 = ssub.s32 %s28, 1
        %s250 = sand.u32 %s53, 1
        %s251 = scalar_lea.sflag [#allocation5], %s250
        %s252 = sand.u32 %s53, 1
        %s253 = smul.addr %s252, 128
        %s254 = scalar_lea.vmem [#allocation4], %s253
        // Predicated region
        $region33: #{tpu_custom_call.1} parent=31 // pred_check
          %p255 = pneg %p66
        $region34: #{tpu_custom_call.1} parent=31 // pred_check_branch
          %257 = sbr.rel (%p255) target = $region36
        $region35: #{tpu_custom_call.1} parent=31 // pred_region
          %258 = dma.done %s251, 2048
        $region36: #{tpu_custom_call.1} parent=31 // pred_fallthru
          _
        %s259 = sand.u32 %s33, 1
        %s260 = scalar_lea.sflag [#allocation8], %s259
        %s261 = sand.u32 %s81, 1
        %s262 = smul.addr %s261, 8
        %s263 = scalar_lea.vmem [#allocation7], %s262
        // Predicated region
        $region37: #{tpu_custom_call.1} parent=31 // pred_check
          %p264 = pneg %p94
        $region38: #{tpu_custom_call.1} parent=31 // pred_check_branch
          %266 = sbr.rel (%p264) target = $region40
        $region39: #{tpu_custom_call.1} parent=31 // pred_region
          %267 = dma.done %s260, 128
        $region40: #{tpu_custom_call.1} parent=31 // pred_fallthru
          _
        // Predicated region
        $region41: #{tpu_custom_call.1} parent=31 // pred_check
          %p268 = pneg %p115
        $region42: #{tpu_custom_call.1} parent=31 // pred_check_branch
          %270 = sbr.rel (%p268) target = $region44
        $region43: #{tpu_custom_call.1} parent=31 // pred_region
          %271 = dma.done [#allocation8], 4096
        $region44: #{tpu_custom_call.1} parent=31 // pred_fallthru
          _
        %s272 = sand.u32 %s53, 1
        %s273 = scalar_lea.sflag [#allocation5], %s272
        %s274 = sand.u32 %s53, 1
        %s275 = smul.addr %s274, 128
        %s276 = scalar_lea.vmem [#allocation4], %s275
        %p277 = pneg %p66
        %p278 = pneg %p63
        %s279 = sand.u32 %s33, 1
        %s280 = scalar_lea.sflag [#allocation8], %s279
        %s281 = sand.u32 %s81, 1
        %s282 = smul.addr %s281, 8
        %s283 = scalar_lea.vmem [#allocation7], %s282
        %p284 = pneg %p94
        %p285 = pneg %p91
        %p286 = pneg %p115
        %p287 = pneg %p112
        %p288 = pneg %p143
        %p289 = pneg %p140
        %s290 = sand.u32 %s130, 1
        %s291 = scalar_lea.sflag [#allocation6], %s290
        %s292 = sand.u32 %s130, 1
        %s293 = smul.addr %s292, 8
        %s294 = scalar_lea.vmem [#allocation10], %s293
        %p295 = pneg %p171
        %p296 = pneg %p168
        %s297 = sand.u32 %s158, 1
        %s298 = scalar_lea.sflag [#allocation12], %s297
        %s299 = sand.u32 %s158, 1
        %s300 = smul.addr %s299, 8
        %s301 = scalar_lea.vmem [#allocation11], %s300
        %v302 = vld [vmem:[%s254] sm:$0xff]
        %v303 = vld [vmem:[%s254 + $0x8] sm:$0xff]
        %v304 = vld [vmem:[%s254 + $0x10] sm:$0xff]
        %v305 = vld [vmem:[%s254 + $0x18] sm:$0xff]
        %v306 = vld [vmem:[%s254 + $0x20] sm:$0xff]
        %v307 = vld [vmem:[%s254 + $0x28] sm:$0xff]
        %v308 = vld [vmem:[%s254 + $0x30] sm:$0xff]
        %v309 = vld [vmem:[%s254 + $0x38] sm:$0xff]
        %v310 = vld [vmem:[%s254 + $0x40] sm:$0xff]
        %v311 = vld [vmem:[%s254 + $0x48] sm:$0xff]
        %v312 = vld [vmem:[%s254 + $0x50] sm:$0xff]
        %v313 = vld [vmem:[%s254 + $0x58] sm:$0xff]
        %v314 = vld [vmem:[%s254 + $0x60] sm:$0xff]
        %v315 = vld [vmem:[%s254 + $0x68] sm:$0xff]
        %v316 = vld [vmem:[%s254 + $0x70] sm:$0xff]
        %v317 = vld [vmem:[%s254 + $0x78] sm:$0xff]
        %v318 = vld [vmem:[%s263] sm:$0xff]
        %319 = vmatprep.subr.mxu0 0.0
        %320 = vmatpush1.xpose.msra.mxu0 %v302
        %321 = vmatprep.subr.mxu0 0.0
        %322 = vmatpush1.xpose.msra.mxu0 %v303
        %323 = vmatprep.subr.mxu0 0.0
        %324 = vmatpush1.xpose.msra.mxu0 %v304
        %325 = vmatprep.subr.mxu0 0.0
        %326 = vmatpush1.xpose.msra.mxu0 %v305
        %327 = vmatprep.subr.mxu0 0.0
        %328 = vmatpush1.xpose.msra.mxu0 %v306
        %329 = vmatprep.subr.mxu0 0.0
        %330 = vmatpush1.xpose.msra.mxu0 %v307
        %331 = vmatprep.subr.mxu0 0.0
        %332 = vmatpush1.xpose.msra.mxu0 %v308
        %333 = vmatprep.subr.mxu0 0.0
        %334 = vmatpush1.xpose.msra.mxu0 %v309
        %335 = vmatprep.subr.mxu0 0.0
        %336 = vmatpush1.xpose.msra.mxu0 %v310
        %337 = vmatprep.subr.mxu0 0.0
        %338 = vmatpush1.xpose.msra.mxu0 %v311
        %339 = vmatprep.subr.mxu0 0.0
        %340 = vmatpush1.xpose.msra.mxu0 %v312
        %341 = vmatprep.subr.mxu0 0.0
        %342 = vmatpush1.xpose.msra.mxu0 %v313
        %343 = vmatprep.subr.mxu0 0.0
        %344 = vmatpush1.xpose.msra.mxu0 %v314
        %345 = vmatprep.subr.mxu0 0.0
        %346 = vmatpush1.xpose.msra.mxu0 %v315
        %347 = vmatprep.subr.mxu0 0.0
        %348 = vmatpush1.xpose.msra.mxu0 %v316
        %349 = vmatprep.subr.mxu0 0.0
        %350 = vmatpush1.xpose.msra.mxu0 %v317
        %351 = vmatprep.subr.mxu0 0.0
        %352 = vmatpush1.xpose.msra.mxu0 0.0
        %353 = vmatprep.subr.mxu0 0.0
        %354 = vmatpush1.xpose.msra.mxu0 0.0
        %355 = vmatprep.subr.mxu0 0.0
        %356 = vmatpush1.xpose.msra.mxu0 0.0
        %357 = vmatprep.subr.mxu0 0.0
        %358 = vmatpush1.xpose.msra.mxu0 0.0
        %359 = vmatprep.subr.mxu0 0.0
        %360 = vmatpush1.xpose.msra.mxu0 0.0
        %361 = vmatprep.subr.mxu0 0.0
        %362 = vmatpush1.xpose.msra.mxu0 0.0
        %363 = vmatprep.subr.mxu0 0.0
        %364 = vmatpush1.xpose.msra.mxu0 0.0
        %365 = vmatprep.subr.mxu0 0.0
        %366 = vmatpush1.xpose.msra.mxu0 0.0
        %367 = vmatprep.subr.mxu0 0.0
        %368 = vmatpush1.xpose.msra.mxu0 0.0
        %369 = vmatprep.subr.mxu0 0.0
        %370 = vmatpush1.xpose.msra.mxu0 0.0
        %371 = vmatprep.subr.mxu0 0.0
        %372 = vmatpush1.xpose.msra.mxu0 0.0
        %373 = vmatprep.subr.mxu0 0.0
        %374 = vmatpush1.xpose.msra.mxu0 0.0
        %375 = vmatprep.subr.mxu0 0.0
        %376 = vmatpush1.xpose.msra.mxu0 0.0
        %377 = vmatprep.subr.mxu0 0.0
        %378 = vmatpush1.xpose.msra.mxu0 0.0
        %379 = vmatprep.subr.mxu0 0.0
        %380 = vmatpush1.xpose.msra.mxu0 0.0
        %381 = vmatprep.subr.mxu0 0.0
        %382 = vmatpush1.xpose.msra.mxu0 0.0
        %383 = vmatprep.mubr.f32.mxu0 0.0
        %384 = vmatmul.mubr.f32.gmra.mrb[0].mxu0 %v318
        %v385 = vpop.f32.mrb[0].mxu0
        %v386 = vadd.f32 0.0, %v385
        %v387 = vpop.f32.mrb[0].mxu0
        %388 = vdwg.mxu0
        %s389 = sld [smem:[#allocation3 + %s37]]
        %v390 = vlaneseq
        %v391 = vand.u32 %v390, 127
        %v392 = vstv %s389
        %vm393 = vcmp.lt.s32.totalorder %v391, %v392
        %v394 = vsel %vm393, %v386, -inf
        %395 = vmax.xlane.f32.xlu0 %v394
        %v396 = vpop.xlane.xlu0 %395
        %v397 = vsub.f32 %v394, %v396
        %v398 = vmul.f32 %v397, 1.442695
        %v399 = vpow.pop %v398
        %400 = vadd.xlane.f32.xlu0 %v399
        %v401 = vpop.xlane.xlu0 %400
        %v402 = vrcp.pop %v401
        %v403 = vmul.f32 %v399, %v402
        %404 = vst [vmem:[%s301] sm:$0xff] %v403
        %405 = vmatprep.subr.mxu0 0.0
        %406 = vmatpush1.msra.mxu0 %v302
        %407 = vmatprep.subr.mxu0 0.0
        %408 = vmatpush1.msra.mxu0 %v303
        %409 = vmatprep.subr.mxu0 0.0
        %410 = vmatpush1.msra.mxu0 %v304
        %411 = vmatprep.subr.mxu0 0.0
        %412 = vmatpush1.msra.mxu0 %v305
        %413 = vmatprep.subr.mxu0 0.0
        %414 = vmatpush1.msra.mxu0 %v306
        %415 = vmatprep.subr.mxu0 0.0
        %416 = vmatpush1.msra.mxu0 %v307
        %417 = vmatprep.subr.mxu0 0.0
        %418 = vmatpush1.msra.mxu0 %v308
        %419 = vmatprep.subr.mxu0 0.0
        %420 = vmatpush1.msra.mxu0 %v309
        %421 = vmatprep.subr.mxu0 0.0
        %422 = vmatpush1.msra.mxu0 %v310
        %423 = vmatprep.subr.mxu0 0.0
        %424 = vmatpush1.msra.mxu0 %v311
        %425 = vmatprep.subr.mxu0 0.0
        %426 = vmatpush1.msra.mxu0 %v312
        %427 = vmatprep.subr.mxu0 0.0
        %428 = vmatpush1.msra.mxu0 %v313
        %429 = vmatprep.subr.mxu0 0.0
        %430 = vmatpush1.msra.mxu0 %v314
        %431 = vmatprep.subr.mxu0 0.0
        %432 = vmatpush1.msra.mxu0 %v315
        %433 = vmatprep.subr.mxu0 0.0
        %434 = vmatpush1.msra.mxu0 %v316
        %435 = vmatprep.subr.mxu0 0.0
        %436 = vmatpush1.msra.mxu0 %v317
        %437 = vmatprep.subr.mxu0 0.0
        %438 = vmatpush1.msra.mxu0 0.0
        %439 = vmatprep.subr.mxu0 0.0
        %440 = vmatpush1.msra.mxu0 0.0
        %441 = vmatprep.subr.mxu0 0.0
        %442 = vmatpush1.msra.mxu0 0.0
        %443 = vmatprep.subr.mxu0 0.0
        %444 = vmatpush1.msra.mxu0 0.0
        %445 = vmatprep.subr.mxu0 0.0
        %446 = vmatpush1.msra.mxu0 0.0
        %447 = vmatprep.subr.mxu0 0.0
        %448 = vmatpush1.msra.mxu0 0.0
        %449 = vmatprep.subr.mxu0 0.0
        %450 = vmatpush1.msra.mxu0 0.0
        %451 = vmatprep.subr.mxu0 0.0
        %452 = vmatpush1.msra.mxu0 0.0
        %453 = vmatprep.subr.mxu0 0.0
        %454 = vmatpush1.msra.mxu0 0.0
        %455 = vmatprep.subr.mxu0 0.0
        %456 = vmatpush1.msra.mxu0 0.0
        %457 = vmatprep.subr.mxu0 0.0
        %458 = vmatpush1.msra.mxu0 0.0
        %459 = vmatprep.subr.mxu0 0.0
        %460 = vmatpush1.msra.mxu0 0.0
        %461 = vmatprep.subr.mxu0 0.0
        %462 = vmatpush1.msra.mxu0 0.0
        %463 = vmatprep.subr.mxu0 0.0
        %464 = vmatpush1.msra.mxu0 0.0
        %465 = vmatprep.subr.mxu0 0.0
        %466 = vmatpush1.msra.mxu0 0.0
        %467 = vmatprep.subr.mxu0 0.0
        %468 = vmatpush1.msra.mxu0 0.0
        %469 = vmatprep.mubr.f32.mxu0 0.0
        %470 = vmatmul.mubr.f32.gmra.mrb[0].mxu0 %v403
        %v471 = vpop.f32.mrb[0].mxu0
        %v472 = vadd.f32 0.0, %v471
        %v473 = vpop.f32.mrb[0].mxu0
        %474 = vdwg.mxu0
        %v475 = vld [vmem:[#allocation9] sm:$0xff]
        %v476 = vld [vmem:[#allocation9 + $0x8] sm:$0xff]
        %v477 = vld [vmem:[#allocation9 + $0x10] sm:$0xff]
        %v478 = vld [vmem:[#allocation9 + $0x18] sm:$0xff]
        %v479 = vld [vmem:[#allocation9 + $0x20] sm:$0xff]
        %v480 = vld [vmem:[#allocation9 + $0x28] sm:$0xff]
        %v481 = vld [vmem:[#allocation9 + $0x30] sm:$0xff]
        %v482 = vld [vmem:[#allocation9 + $0x38] sm:$0xff]
        %v483 = vld [vmem:[#allocation9 + $0x40] sm:$0xff]
        %v484 = vld [vmem:[#allocation9 + $0x48] sm:$0xff]
        %v485 = vld [vmem:[#allocation9 + $0x50] sm:$0xff]
        %v486 = vld [vmem:[#allocation9 + $0x58] sm:$0xff]
        %v487 = vld [vmem:[#allocation9 + $0x60] sm:$0xff]
        %v488 = vld [vmem:[#allocation9 + $0x68] sm:$0xff]
        %v489 = vld [vmem:[#allocation9 + $0x70] sm:$0xff]
        %v490 = vld [vmem:[#allocation9 + $0x78] sm:$0xff]
        %v491 = vld [vmem:[#allocation9 + $0x80] sm:$0xff]
        %v492 = vld [vmem:[#allocation9 + $0x88] sm:$0xff]
        %v493 = vld [vmem:[#allocation9 + $0x90] sm:$0xff]
        %v494 = vld [vmem:[#allocation9 + $0x98] sm:$0xff]
        %v495 = vld [vmem:[#allocation9 + $0xa0] sm:$0xff]
        %v496 = vld [vmem:[#allocation9 + $0xa8] sm:$0xff]
        %v497 = vld [vmem:[#allocation9 + $0xb0] sm:$0xff]
        %v498 = vld [vmem:[#allocation9 + $0xb8] sm:$0xff]
        %v499 = vld [vmem:[#allocation9 + $0xc0] sm:$0xff]
        %v500 = vld [vmem:[#allocation9 + $0xc8] sm:$0xff]
        %v501 = vld [vmem:[#allocation9 + $0xd0] sm:$0xff]
        %v502 = vld [vmem:[#allocation9 + $0xd8] sm:$0xff]
        %v503 = vld [vmem:[#allocation9 + $0xe0] sm:$0xff]
        %v504 = vld [vmem:[#allocation9 + $0xe8] sm:$0xff]
        %v505 = vld [vmem:[#allocation9 + $0xf0] sm:$0xff]
        %v506 = vld [vmem:[#allocation9 + $0xf8] sm:$0xff]
        %507 = vmatprep.subr.mxu0 0.0
        %508 = vmatpush1.msra.mxu0 %v491
        %509 = vmatprep.subr.mxu0 0.0
        %510 = vmatpush1.msra.mxu0 %v492
        %511 = vmatprep.subr.mxu0 0.0
        %512 = vmatpush1.msra.mxu0 %v493
        %513 = vmatprep.subr.mxu0 0.0
        %514 = vmatpush1.msra.mxu0 %v494
        %515 = vmatprep.subr.mxu0 0.0
        %516 = vmatpush1.msra.mxu0 %v495
        %517 = vmatprep.subr.mxu0 0.0
        %518 = vmatpush1.msra.mxu0 %v496
        %519 = vmatprep.subr.mxu0 0.0
        %520 = vmatpush1.msra.mxu0 %v497
        %521 = vmatprep.subr.mxu0 0.0
        %522 = vmatpush1.msra.mxu0 %v498
        %523 = vmatprep.subr.mxu0 0.0
        %524 = vmatpush1.msra.mxu0 %v499
        %525 = vmatprep.subr.mxu0 0.0
        %526 = vmatpush1.msra.mxu0 %v500
        %527 = vmatprep.subr.mxu0 0.0
        %528 = vmatpush1.msra.mxu0 %v501
        %529 = vmatprep.subr.mxu0 0.0
        %530 = vmatpush1.msra.mxu0 %v502
        %531 = vmatprep.subr.mxu0 0.0
        %532 = vmatpush1.msra.mxu0 %v503
        %533 = vmatprep.subr.mxu0 0.0
        %534 = vmatpush1.msra.mxu0 %v504
        %535 = vmatprep.subr.mxu0 0.0
        %536 = vmatpush1.msra.mxu0 %v505
        %537 = vmatprep.subr.mxu0 0.0
        %538 = vmatpush1.msra.mxu0 %v506
        %539 = vmatprep.subr.mxu0 0.0
        %540 = vmatpush1.msra.mxu0 0.0
        %541 = vmatprep.subr.mxu0 0.0
        %542 = vmatpush1.msra.mxu0 0.0
        %543 = vmatprep.subr.mxu0 0.0
        %544 = vmatpush1.msra.mxu0 0.0
        %545 = vmatprep.subr.mxu0 0.0
        %546 = vmatpush1.msra.mxu0 0.0
        %547 = vmatprep.subr.mxu0 0.0
        %548 = vmatpush1.msra.mxu0 0.0
        %549 = vmatprep.subr.mxu0 0.0
        %550 = vmatpush1.msra.mxu0 0.0
        %551 = vmatprep.subr.mxu0 0.0
        %552 = vmatpush1.msra.mxu0 0.0
        %553 = vmatprep.subr.mxu0 0.0
        %554 = vmatpush1.msra.mxu0 0.0
        %555 = vmatprep.subr.mxu0 0.0
        %556 = vmatpush1.msra.mxu0 0.0
        %557 = vmatprep.subr.mxu0 0.0
        %558 = vmatpush1.msra.mxu0 0.0
        %559 = vmatprep.subr.mxu0 0.0
        %560 = vmatpush1.msra.mxu0 0.0
        %561 = vmatprep.subr.mxu0 0.0
        %562 = vmatpush1.msra.mxu0 0.0
        %563 = vmatprep.subr.mxu0 0.0
        %564 = vmatpush1.msra.mxu0 0.0
        %565 = vmatprep.subr.mxu0 0.0
        %566 = vmatpush1.msra.mxu0 0.0
        %567 = vmatprep.subr.mxu0 0.0
        %568 = vmatpush1.msra.mxu0 0.0
        %569 = vmatprep.subr.mxu0 0.0
        %570 = vmatpush1.msra.mxu0 0.0
        %571 = vmatprep.mubr.f32.mxu0 0.0
        %572 = vmatmul.mubr.f32.gmra.mrb[0].mxu0 %v318
        %v573 = vpop.f32.mrb[0].mxu0
        %v574 = vadd.f32 0.0, %v573
        %v575 = vpop.f32.mrb[0].mxu0
        %576 = vdwg.mxu0
        %577 = vmatprep.subr.mxu0 0.0
        %578 = vmatpush1.msra.mxu0 %v475
        %579 = vmatprep.subr.mxu0 0.0
        %580 = vmatpush1.msra.mxu0 %v476
        %581 = vmatprep.subr.mxu0 0.0
        %582 = vmatpush1.msra.mxu0 %v477
        %583 = vmatprep.subr.mxu0 0.0
        %584 = vmatpush1.msra.mxu0 %v478
        %585 = vmatprep.subr.mxu0 0.0
        %586 = vmatpush1.msra.mxu0 %v479
        %587 = vmatprep.subr.mxu0 0.0
        %588 = vmatpush1.msra.mxu0 %v480
        %589 = vmatprep.subr.mxu0 0.0
        %590 = vmatpush1.msra.mxu0 %v481
        %591 = vmatprep.subr.mxu0 0.0
        %592 = vmatpush1.msra.mxu0 %v482
        %593 = vmatprep.subr.mxu0 0.0
        %594 = vmatpush1.msra.mxu0 %v483
        %595 = vmatprep.subr.mxu0 0.0
        %596 = vmatpush1.msra.mxu0 %v484
        %597 = vmatprep.subr.mxu0 0.0
        %598 = vmatpush1.msra.mxu0 %v485
        %599 = vmatprep.subr.mxu0 0.0
        %600 = vmatpush1.msra.mxu0 %v486
        %601 = vmatprep.subr.mxu0 0.0
        %602 = vmatpush1.msra.mxu0 %v487
        %603 = vmatprep.subr.mxu0 0.0
        %604 = vmatpush1.msra.mxu0 %v488
        %605 = vmatprep.subr.mxu0 0.0
        %606 = vmatpush1.msra.mxu0 %v489
        %607 = vmatprep.subr.mxu0 0.0
        %608 = vmatpush1.msra.mxu0 %v490
        %609 = vmatprep.subr.mxu0 0.0
        %610 = vmatpush1.msra.mxu0 0.0
        %611 = vmatprep.subr.mxu0 0.0
        %612 = vmatpush1.msra.mxu0 0.0
        %613 = vmatprep.subr.mxu0 0.0
        %614 = vmatpush1.msra.mxu0 0.0
        %615 = vmatprep.subr.mxu0 0.0
        %616 = vmatpush1.msra.mxu0 0.0
        %617 = vmatprep.subr.mxu0 0.0
        %618 = vmatpush1.msra.mxu0 0.0
        %619 = vmatprep.subr.mxu0 0.0
        %620 = vmatpush1.msra.mxu0 0.0
        %621 = vmatprep.subr.mxu0 0.0
        %622 = vmatpush1.msra.mxu0 0.0
        %623 = vmatprep.subr.mxu0 0.0
        %624 = vmatpush1.msra.mxu0 0.0
        %625 = vmatprep.subr.mxu0 0.0
        %626 = vmatpush1.msra.mxu0 0.0
        %627 = vmatprep.subr.mxu0 0.0
        %628 = vmatpush1.msra.mxu0 0.0
        %629 = vmatprep.subr.mxu0 0.0
        %630 = vmatpush1.msra.mxu0 0.0
        %631 = vmatprep.subr.mxu0 0.0
        %632 = vmatpush1.msra.mxu0 0.0
        %633 = vmatprep.subr.mxu0 0.0
        %634 = vmatpush1.msra.mxu0 0.0
        %635 = vmatprep.subr.mxu0 0.0
        %636 = vmatpush1.msra.mxu0 0.0
        %637 = vmatprep.subr.mxu0 0.0
        %638 = vmatpush1.msra.mxu0 0.0
        %639 = vmatprep.subr.mxu0 0.0
        %640 = vmatpush1.msra.mxu0 0.0
        %641 = vmatprep.mubr.f32.mxu0 0.0
        %642 = vmatmul.mubr.f32.gmra.mrb[0].mxu0 %v472
        %v643 = vpop.f32.mrb[0].mxu0
        %v644 = vadd.f32 %v574, %v643
        %v645 = vpop.f32.mrb[0].mxu0
        %646 = vdwg.mxu0
        %647 = vst [vmem:[%s294] sm:$0xff] %v644
        %s648 = sand.u32 %s130, 1
        %s649 = scalar_lea.sflag [#allocation6], %s648
        %s650 = sand.u32 %s130, 1
        %s651 = smul.addr %s650, 8
        %s652 = scalar_lea.vmem [#allocation10], %s651
        %s653 = sand.u32 %s158, 1
        %s654 = scalar_lea.sflag [#allocation12], %s653
        %s655 = sand.u32 %s158, 1
        %s656 = smul.addr %s655, 8
        %s657 = scalar_lea.vmem [#allocation11], %s656
        // Predicated region
        $region45: #{tpu_custom_call.1} parent=31 // pred_check
          %p658 = pneg %p140
        $region46: #{tpu_custom_call.1} parent=31 // pred_check_branch
          %660 = sbr.rel (%p658) target = $region48
        $region47: #{tpu_custom_call.1} parent=31 // pred_region
          %s662 = ssub.s32 128, 128
          %663 = vsyncadd %s649, %s662
          %s664 = sadd.s32 %s38, %s37
          %s665 = smul.addr %s664, 128
          %s666 = scalar_lea.hbm %s4, %s665
          %s668 = sshll.u32 %s652, 4
          %s669 = int_to_ptr.vmem [resolvable:$true] %s668
          %671 = dma.vmem_to_hbm [thread:$0]  %s669, 128, %s666, %s649
        $region48: #{tpu_custom_call.1} parent=31 // pred_fallthru
          _
        // Predicated region
        $region49: #{tpu_custom_call.1} parent=31 // pred_check
          %p672 = pneg %p168
        $region50: #{tpu_custom_call.1} parent=31 // pred_check_branch
          %674 = sbr.rel (%p672) target = $region52
        $region51: #{tpu_custom_call.1} parent=31 // pred_region
          %s676 = ssub.s32 128, 128
          %677 = vsyncadd %s654, %s676
          %s678 = sadd.s32 %s38, %s37
          %s679 = smul.addr %s678, 128
          %s680 = scalar_lea.hbm %s5, %s679
          %s682 = sshll.u32 %s657, 4
          %s683 = int_to_ptr.vmem [resolvable:$true] %s682
          %685 = dma.vmem_to_hbm [thread:$0]  %s683, 128, %s680, %s654
        $region52: #{tpu_custom_call.1} parent=31 // pred_fallthru
          _
      $region32: #{tpu_custom_call.1} parent=5 // pred_fallthru
        _
      %p686 = scmp.le.s32.totalorder 2, %s28
      // Predicated region
      $region53: #{tpu_custom_call.1} parent=5 // pred_check
        %p687 = pneg %p686
      $region54: #{tpu_custom_call.1} parent=5 // pred_check_branch
        %689 = sbr.rel (%p687) target = $region56
      $region55: #{tpu_custom_call.1} parent=5 // pred_region
        %s690 = ssub.s32 %s28, 2
        // Predicated region
        $region57: #{tpu_custom_call.1} parent=55 // pred_check
          %p691 = pneg %p146
        $region58: #{tpu_custom_call.1} parent=55 // pred_check_branch
          %693 = sbr.rel (%p691) target = $region60
        $region59: #{tpu_custom_call.1} parent=55 // pred_region
          %s694 = sand.u32 %s131, 1
          %s695 = scalar_lea.sflag [#allocation6], %s694
          %s696 = sand.u32 %s131, 1
          %s697 = smul.addr %s696, 8
          %s698 = scalar_lea.vmem [#allocation10], %s697
          %699 = dma.done %s695, 128
        $region60: #{tpu_custom_call.1} parent=55 // pred_fallthru
          _
        // Predicated region
        $region61: #{tpu_custom_call.1} parent=55 // pred_check
          %p700 = pneg %p174
        $region62: #{tpu_custom_call.1} parent=55 // pred_check_branch
          %702 = sbr.rel (%p700) target = $region64
        $region63: #{tpu_custom_call.1} parent=55 // pred_region
          %s703 = sand.u32 %s159, 1
          %s704 = scalar_lea.sflag [#allocation12], %s703
          %s705 = sand.u32 %s159, 1
          %s706 = smul.addr %s705, 8
          %s707 = scalar_lea.vmem [#allocation11], %s706
          %708 = dma.done %s704, 128
        $region64: #{tpu_custom_call.1} parent=55 // pred_fallthru
          _
      $region56: #{tpu_custom_call.1} parent=5 // pred_fallthru
        _
    $region6: #{tpu_custom_call.1} parent=1 // loop_footer
      %s32 = sadd.s32 1, %s28
    $region7: #{tpu_custom_call.1} parent=1 // loop_footer_branch
      %27 = sbr.rel target = $region3
    $region8: #{tpu_custom_call.1} parent=1 // loop_exit
      _
    %709 = vsyncpa [#allocation5], 1
    %s710 = scalar_lea.sflag [#allocation5], 1
    %711 = vsyncpa %s710, 1
    %712 = vsyncpa [#allocation8], 1
    %s713 = scalar_lea.sflag [#allocation8], 1
    %714 = vsyncpa %s713, 1
    %715 = vsyncpa [#allocation6], 1
    %s716 = scalar_lea.sflag [#allocation6], 1
    %717 = vsyncpa %s716, 1
    %718 = vsyncpa [#allocation12], 1
    %s719 = scalar_lea.sflag [#allocation12], 1
    %720 = vsyncpa %s719, 1

</llo_original>
